<compile_context>
chip_gen: v7x
topology: tpu7x:2x2x1
jax: 0.10.0
libtpu: 0.0.40
codegen_flags: <defaults>
</compile_context>

<pallas_src>
import math

import jax
import jax.numpy as jnp
from jax.experimental import pallas as pl
from jax.experimental.pallas import tpu as pltpu

IN_SIZE = 4           # mechanism in_size
TN_MAX = 128          # max test-row tile (keeps >=2 parallel i-blocks on v7x
                      # for production N >= 256)
M_TILE_MAX = 4096     # max training-column tile; below this the whole training
                      # set is one VMEM-resident j-block


def _round_up(x, m):
    return ((x + m - 1) // m) * m


def _rq_posterior_mean_kernel(params_ref, x_ref, xn_ref, xt2_ref, xtn_ref,
                              alpha_ref, o_ref, acc_ref):
    """One (TN test rows) x (MT training cols) tile of the posterior mean."""
    j = pl.program_id(1)

    @pl.when(j == 0)
    def _():
        acc_ref[...] = jnp.zeros_like(acc_ref)

    inv_denom = params_ref[0]      # 1 / (2 * rq_alpha * lengthscale^2)
    neg_alpha = params_ref[1]      # -rq_alpha

    # Pairwise squared distances on the MXU:
    #   d2 = ||x||^2 + ||xt||^2 - 2 x.xt      (xt2_ref already holds 2*xt^T)
    # Clamped at 0 to guard against cancellation when points nearly coincide.
    xy2 = jnp.dot(x_ref[...], xt2_ref[...],
                  preferred_element_type=jnp.float32)            # (TN, MT)
    d2 = jnp.maximum(xn_ref[...] + xtn_ref[...] - xy2, 0.0)

    # rational quadratic kernel; outputscale is pre-folded into alpha weights.
    base = 1.0 + d2 * inv_denom
    k = jnp.exp(neg_alpha * jnp.log(base))                       # EUP-bound
    # TODO(synk): on v6e/v7x the exp could run in bfloat16 on the EUP for ~2x
    # throughput; kept f32 so v5e (no bf16 VPU/EUP) does not regress and the
    # 1e-3 accuracy budget holds.

    w = k * alpha_ref[...]                                       # (TN, MT)

    # Lane-dense accumulation: fold MT lanes into the (TN, 128) accumulator
    # with vreg-aligned VPU adds (static 128-lane slices, no relayout); the
    # single cross-lane XLU reduce is deferred to the last j step.
    acc = acc_ref[...]
    for g in range(w.shape[1] // 128):
        acc = acc + w[:, g * 128:(g + 1) * 128]
    acc_ref[...] = acc

    @pl.when(j == pl.num_programs(1) - 1)
    def _():
        o_ref[...] = jnp.sum(acc_ref[...], axis=-1, keepdims=True)


def gp_posterior_mean_pallas(params, x_flat, x_norm, xt2_t, xt_norm, alpha_row,
                             *, tn, m_tile):
    """params: (2,) f32 SMEM scalars; x_flat: (N, D); x_norm: (N, 1);
    xt2_t: (D, M) holding 2*train_x^T; xt_norm: (1, M); alpha_row: (1, M) with
    outputscale folded in. Returns (N, 1) f32."""
    N, D = x_flat.shape
    M = xt2_t.shape[1]
    assert N % tn == 0 and M % m_tile == 0 and m_tile % 128 == 0

    i_blocks, j_blocks = N // tn, M // m_tile
    # training arrays are only re-streamed per i-block when the j axis is tiled
    stream = i_blocks if j_blocks > 1 else 1
    cost = pl.CostEstimate(
        flops=int(2 * N * M * D + 8 * N * M),
        transcendentals=int(2 * N * M),
        bytes_accessed=int(4 * (x_flat.size + x_norm.size + N
                                + stream * (xt2_t.size + xt_norm.size
                                            + alpha_row.size))),
    )

    return pl.pallas_call(
        _rq_posterior_mean_kernel,
        out_shape=jax.ShapeDtypeStruct((N, 1), jnp.float32),
        grid=(i_blocks, j_blocks),
        in_specs=[
            pl.BlockSpec(memory_space=pltpu.MemorySpace.SMEM),    # params
            pl.BlockSpec((tn, D), lambda i, j: (i, 0)),           # test rows
            pl.BlockSpec((tn, 1), lambda i, j: (i, 0)),           # ||x||^2
            pl.BlockSpec((D, m_tile), lambda i, j: (0, j)),       # 2*train^T
            pl.BlockSpec((1, m_tile), lambda i, j: (0, j)),       # ||xt||^2
            pl.BlockSpec((1, m_tile), lambda i, j: (0, j)),       # weights
        ],
        out_specs=pl.BlockSpec((tn, 1), lambda i, j: (i, 0)),
        scratch_shapes=[pltpu.VMEM((tn, 128), jnp.float32)],
        compiler_params=pltpu.CompilerParams(
            dimension_semantics=("parallel", "arbitrary"),
            vmem_limit_bytes=32 * 1024 * 1024),
        cost_estimate=cost,
    )(params, x_flat, x_norm, xt2_t, xt_norm, alpha_row)


def _rq_kernel_matrix(x1, x2, outputscale, lengthscale, rq_alpha):
    """Plain-JAX RQ kernel (setup + reference check), direct-difference form."""
    diff = x1[:, None, :] - x2[None, :, :]
    d2 = jnp.sum(diff * diff, axis=-1)
    base = 1.0 + d2 / (2.0 * rq_alpha * lengthscale ** 2)
    return outputscale * base ** (-rq_alpha)


def gaussian_process_forward(inputs, train_x, alpha_vec, *,
                             outputscale, lengthscale, rq_alpha):
    """Mirrors GaussianProcess.forward: output shape (*inputs.shape[:-1], 1)."""
    assert inputs.ndim >= 2 and inputs.shape[-1] == IN_SIZE
    batch_shape = inputs.shape[:-1]
    x_flat = inputs.reshape(-1, IN_SIZE).astype(jnp.float32)

    # test-row tile: sublane minimum is 8, capped at 128; pad rows to it
    N = x_flat.shape[0]
    tn = min(TN_MAX, _round_up(N, 8))
    N_pad = _round_up(N, tn)
    x_flat = jnp.pad(x_flat, ((0, N_pad - N), (0, 0)))
    x_norm = jnp.sum(x_flat * x_flat, axis=-1, keepdims=True)     # (N_pad, 1)

    # training-column tile: whole (padded) set if it fits, else tiles of 4096
    M = train_x.shape[0]
    m_tile = min(M_TILE_MAX, _round_up(M, 128))
    M_pad = _round_up(M, m_tile)

    xt = train_x.astype(jnp.float32)
    # pre-scale by 2 so the in-kernel matmul already carries the -2*x.xt factor
    xt2_t = jnp.pad(2.0 * xt.T, ((0, 0), (0, M_pad - M)))         # (D, M_pad)
    xt_norm = jnp.pad(jnp.sum(xt * xt, axis=-1).reshape(1, -1),
                      ((0, 0), (0, M_pad - M)))                   # (1, M_pad)
    # fold outputscale into the representer weights (one-time setup op);
    # lane-dense (1, M_pad) layout; zero padding nulls the padded columns.
    alpha_row = jnp.pad(
        (outputscale * alpha_vec.astype(jnp.float32)).reshape(1, -1),
        ((0, 0), (0, M_pad - M)))

    params = jnp.array(
        [1.0 / (2.0 * rq_alpha * lengthscale * lengthscale), -rq_alpha],
        dtype=jnp.float32)

    mean = gp_posterior_mean_pallas(params, x_flat, x_norm, xt2_t, xt_norm,
                                    alpha_row, tn=tn, m_tile=m_tile)
    return mean[:N].reshape(*batch_shape, 1)


if __name__ == "__main__":
    key = jax.random.PRNGKey(0)
    k_trainx, k_eps, k_in = jax.random.split(key, 3)

    # --- deterministic "posterior" hyperparameters (prior means, mirroring
    #     select_hyperparameters / the module's Gamma priors) ---
    noise = 50.0 / 500.0                     # Gamma(50, 500).mean
    outputscale = 100.0 / 10.0               # Gamma(100, 10).mean
    lengthscale = float(IN_SIZE)             # Gamma(30*d, 30).mean
    rq_alpha = math.log(2.0)                 # gpytorch RQKernel default alpha

    # --- init_as_static: training data ---
    num_train = 50 * IN_SIZE
    train_x = 20.0 * (jax.random.uniform(k_trainx, (num_train, IN_SIZE),
                                         dtype=jnp.float32) - 0.5)
    K_train = _rq_kernel_matrix(train_x, train_x, outputscale, lengthscale,
                                rq_alpha)
    K_noisy = K_train + noise * jnp.eye(num_train, dtype=jnp.float32)
    # sample train_y from the GP prior (+ observation noise), deterministically
    L = jnp.linalg.cholesky(K_noisy + 1e-6 * jnp.eye(num_train,
                                                     dtype=jnp.float32))
    train_y = L @ jax.random.normal(k_eps, (num_train,), dtype=jnp.float32)
    # TODO(synk): Cholesky / triangular solve has no clean Pallas equivalent;
    # the representer weights (set_data stage) are precomputed in plain JAX.
    alpha_vec = jax.scipy.linalg.cho_solve((L, True), train_y)

    # --- mechanism inputs: (batch=2, seq=8, in_size=4) ---
    inputs = 20.0 * (jax.random.uniform(k_in, (2, 8, IN_SIZE),
                                        dtype=jnp.float32) - 0.5)

    out = gaussian_process_forward(
        inputs, train_x, alpha_vec,
        outputscale=outputscale, lengthscale=lengthscale, rq_alpha=rq_alpha)
    out = jax.block_until_ready(out)
    assert out.shape == (2, 8, 1), out.shape

    # pure-JAX reference check
    x_flat = inputs.reshape(-1, IN_SIZE)
    k_star = _rq_kernel_matrix(x_flat, train_x, outputscale, lengthscale,
                               rq_alpha)
    ref = (k_star @ alpha_vec).reshape(2, 8, 1)
    assert jnp.allclose(out, ref, rtol=1e-3, atol=1e-3), (
        float(jnp.max(jnp.abs(out - ref))))

    print("KERNEL_OK")
</pallas_src>

<mosaic_0001>
module attributes {stable_mosaic.version = 11 : i64} {
  func.func @_rq_posterior_mean_kernel(%arg0: i32, %arg1: i32, %arg2: memref<2xf32, #tpu.memory_space<smem>>, %arg3: memref<16x4xf32, #tpu.memory_space<vmem>>, %arg4: memref<16x1xf32, #tpu.memory_space<vmem>>, %arg5: memref<4x256xf32, #tpu.memory_space<vmem>>, %arg6: memref<1x256xf32, #tpu.memory_space<vmem>>, %arg7: memref<1x256xf32, #tpu.memory_space<vmem>>, %arg8: memref<16x1xf32, #tpu.memory_space<vmem>>, %arg9: memref<16x128xf32, #tpu.memory_space<vmem>>) attributes {dimension_semantics = [#tpu.dimension_semantics<parallel>, #tpu.dimension_semantics<arbitrary>], iteration_bounds = array<i64: 1, 1>, scalar_prefetch = 0 : i64, scratch_operands = 1 : i64, tpu.core_type = #tpu.core_type<tc>, window_params = [{transform_indices = @transform_0, window_bounds = array<i64: 2>}, {transform_indices = @transform_1, window_bounds = array<i64: 16, 4>}, {transform_indices = @transform_2, window_bounds = array<i64: 16, 1>}, {transform_indices = @transform_3, window_bounds = array<i64: 4, 256>}, {transform_indices = @transform_4, window_bounds = array<i64: 1, 256>}, {transform_indices = @transform_5, window_bounds = array<i64: 1, 256>}, {transform_indices = @transform_6, window_bounds = array<i64: 16, 1>}]} {
    %c0_i32 = arith.constant 0 : i32
    %0 = arith.cmpi eq, %arg1, %c0_i32 : i32
    %1 = arith.extui %0 : i1 to i32
    %c0_i32_0 = arith.constant 0 : i32
    %2 = arith.cmpi ne, %1, %c0_i32_0 : i32
    scf.if %2 {
      %cst_19 = arith.constant 0.000000e+00 : f32
      %36 = vector.broadcast %cst_19 : f32 to vector<16x128xf32>
      %c0_20 = arith.constant 0 : index
      %c0_21 = arith.constant 0 : index
      %37 = vector.load %arg9[%c0_20, %c0_21] : memref<16x128xf32, #tpu.memory_space<vmem>>, vector<16x128xf32>
      tpu.vector_store %arg9[%c0_20, %c0_21], %36 {strides = array<i32>} : memref<16x128xf32, #tpu.memory_space<vmem>>, vector<16x128xf32>,
    } else {
    }
    %c0 = arith.constant 0 : index
    %3 = memref.load %arg2[%c0] : memref<2xf32, #tpu.memory_space<smem>>
    %c1 = arith.constant 1 : index
    %4 = memref.load %arg2[%c1] : memref<2xf32, #tpu.memory_space<smem>>
    %c0_1 = arith.constant 0 : index
    %c0_2 = arith.constant 0 : index
    %5 = vector.load %arg3[%c0_1, %c0_2] : memref<16x4xf32, #tpu.memory_space<vmem>>, vector<16x4xf32>
    %c0_3 = arith.constant 0 : index
    %c0_4 = arith.constant 0 : index
    %6 = vector.load %arg5[%c0_3, %c0_4] : memref<4x256xf32, #tpu.memory_space<vmem>>, vector<4x256xf32>
    %cst = arith.constant dense<0.000000e+00> : vector<16x256xf32>
    %7 = tpu.matmul %5, %6, %cst {dimension_numbers = #tpu.dot_dimension_numbers<[1], [0], [0], [1], [0, 0, 1, 1], [], []>} : vector<16x4xf32>, vector<4x256xf32>, vector<16x256xf32> -> vector<16x256xf32>
    %c0_5 = arith.constant 0 : index
    %c0_6 = arith.constant 0 : index
    %8 = vector.load %arg4[%c0_5, %c0_6] : memref<16x1xf32, #tpu.memory_space<vmem>>, vector<16x1xf32>
    %c0_7 = arith.constant 0 : index
    %c0_8 = arith.constant 0 : index
    %9 = vector.load %arg6[%c0_7, %c0_8] : memref<1x256xf32, #tpu.memory_space<vmem>>, vector<1x256xf32>
    %10 = vector.broadcast %8 : vector<16x1xf32> to vector<16x256xf32>
    %11 = vector.broadcast %9 : vector<1x256xf32> to vector<16x256xf32>
    %12 = arith.addf %10, %11 : vector<16x256xf32>
    %13 = arith.subf %12, %7 : vector<16x256xf32>
    %cst_9 = arith.constant 0.000000e+00 : f32
    %14 = vector.broadcast %cst_9 : f32 to vector<16x256xf32>
    %15 = arith.maximumf %13, %14 : vector<16x256xf32>
    %16 = vector.broadcast %3 : f32 to vector<16x256xf32>
    %17 = arith.mulf %15, %16 : vector<16x256xf32>
    %cst_10 = arith.constant 1.000000e+00 : f32
    %18 = vector.broadcast %cst_10 : f32 to vector<16x256xf32>
    %19 = arith.addf %18, %17 : vector<16x256xf32>
    %20 = math.log %19 : vector<16x256xf32>
    %21 = vector.broadcast %4 : f32 to vector<16x256xf32>
    %22 = arith.mulf %21, %20 : vector<16x256xf32>
    %23 = math.exp %22 : vector<16x256xf32>
    %c0_11 = arith.constant 0 : index
    %c0_12 = arith.constant 0 : index
    %24 = vector.load %arg7[%c0_11, %c0_12] : memref<1x256xf32, #tpu.memory_space<vmem>>, vector<1x256xf32>
    %25 = vector.broadcast %24 : vector<1x256xf32> to vector<16x256xf32>
    %26 = arith.mulf %23, %25 : vector<16x256xf32>
    %c0_13 = arith.constant 0 : index
    %c0_14 = arith.constant 0 : index
    %27 = vector.load %arg9[%c0_13, %c0_14] : memref<16x128xf32, #tpu.memory_space<vmem>>, vector<16x128xf32>
    %28 = vector.extract_strided_slice %26 {offsets = [0, 0], sizes = [16, 128], strides = [1, 1]} : vector<16x256xf32> to vector<16x128xf32>
    %29 = arith.addf %27, %28 : vector<16x128xf32>
    %30 = vector.extract_strided_slice %26 {offsets = [0, 128], sizes = [16, 128], strides = [1, 1]} : vector<16x256xf32> to vector<16x128xf32>
    %31 = arith.addf %29, %30 : vector<16x128xf32>
    %c0_15 = arith.constant 0 : index
    %c0_16 = arith.constant 0 : index
    %32 = vector.load %arg9[%c0_15, %c0_16] : memref<16x128xf32, #tpu.memory_space<vmem>>, vector<16x128xf32>
    tpu.vector_store %arg9[%c0_15, %c0_16], %31 {strides = array<i32>} : memref<16x128xf32, #tpu.memory_space<vmem>>, vector<16x128xf32>,
    %c0_i32_17 = arith.constant 0 : i32
    %33 = arith.cmpi eq, %arg1, %c0_i32_17 : i32
    %34 = arith.extui %33 : i1 to i32
    %c0_i32_18 = arith.constant 0 : i32
    %35 = arith.cmpi ne, %34, %c0_i32_18 : i32
    scf.if %35 {
      %c0_19 = arith.constant 0 : index
      %c0_20 = arith.constant 0 : index
      %36 = vector.load %arg9[%c0_19, %c0_20] : memref<16x128xf32, #tpu.memory_space<vmem>>, vector<16x128xf32>
      %cst_21 = arith.constant dense<0.000000e+00> : vector<16xf32>
      %37 = vector.multi_reduction <add>, %36, %cst_21 [1] : vector<16x128xf32> to vector<16xf32>
      %38 = vector.shape_cast %37 : vector<16xf32> to vector<16x1xf32>
      %c0_22 = arith.constant 0 : index
      %c0_23 = arith.constant 0 : index
      %39 = vector.load %arg8[%c0_22, %c0_23] : memref<16x1xf32, #tpu.memory_space<vmem>>, vector<16x1xf32>
      tpu.vector_store %arg8[%c0_22, %c0_23], %38 {strides = array<i32>} : memref<16x1xf32, #tpu.memory_space<vmem>>, vector<16x1xf32>,
    } else {
    }
    return
  }
  func.func @transform_0(%arg0: i32, %arg1: i32) -> i32 {
    %c0_i32 = arith.constant 0 : i32
    %c0_i32_0 = arith.constant 0 : i32
    return %c0_i32 : i32
  }
  func.func @transform_1(%arg0: i32, %arg1: i32) -> (i32, i32) {
    %c0_i32 = arith.constant 0 : i32
    %c0_i32_0 = arith.constant 0 : i32
    return %arg0, %c0_i32 : i32, i32
  }
  func.func @transform_2(%arg0: i32, %arg1: i32) -> (i32, i32) {
    %c0_i32 = arith.constant 0 : i32
    %c0_i32_0 = arith.constant 0 : i32
    return %arg0, %c0_i32 : i32, i32
  }
  func.func @transform_3(%arg0: i32, %arg1: i32) -> (i32, i32) {
    %c0_i32 = arith.constant 0 : i32
    %c0_i32_0 = arith.constant 0 : i32
    return %c0_i32, %arg1 : i32, i32
  }
  func.func @transform_4(%arg0: i32, %arg1: i32) -> (i32, i32) {
    %c0_i32 = arith.constant 0 : i32
    %c0_i32_0 = arith.constant 0 : i32
    return %c0_i32, %arg1 : i32, i32
  }
  func.func @transform_5(%arg0: i32, %arg1: i32) -> (i32, i32) {
    %c0_i32 = arith.constant 0 : i32
    %c0_i32_0 = arith.constant 0 : i32
    return %c0_i32, %arg1 : i32, i32
  }
  func.func @transform_6(%arg0: i32, %arg1: i32) -> (i32, i32) {
    %c0_i32 = arith.constant 0 : i32
    %c0_i32_0 = arith.constant 0 : i32
    return %arg0, %c0_i32 : i32, i32
  }
}

</mosaic_0001>

<llo_original>
// kernel: tpu_custom_call.1
$region0: #{tpu_custom_call.1}
  #allocation0 [shape = 'u32[]', space=smem, size = 0x4, offset = 0x4, fixed_abs, tag = 'smem constant byte address 0x4 - core index']
  #allocation1 [shape = 'u32[144,128]{1,0:T(1,128)}', space=vmem, size = 0x12000, scoped, tag = 'internal scratch']
  #allocation2 [shape = 'f32[16,128]{1,0:T(8,128)}', space=vmem, size = 0x2000, scoped, tag = 'scratch operand']
  %s0 = inlined_call_operand.vmem [shape: f32[2], index: 0, kind: input, shape index: {}]
  %s1 = inlined_call_operand.vmem [shape: f32[16,4], index: 1, kind: input, shape index: {}]
  %s2 = inlined_call_operand.vmem [shape: f32[16,1], index: 2, kind: input, shape index: {}]
  %s3 = inlined_call_operand.vmem [shape: f32[4,256], index: 3, kind: input, shape index: {}]
  %s4 = inlined_call_operand.vmem [shape: f32[1,256], index: 4, kind: input, shape index: {}]
  %s5 = inlined_call_operand.vmem [shape: f32[1,256], index: 5, kind: input, shape index: {}]
  %s6 = inlined_call_operand.vmem [shape: f32[16,1], index: 6, kind: output, shape index: {}]
  %s7 = sld [smem:[#allocation0]]
  $region46: #{tpu_custom_call.1} parent=0
    _
  %s9 = ssub.s32 1, %s7
  %s10 = scalar_select 0, %s9, %s7
  $region1: #{tpu_custom_call.1} parent=0
    #allocation3 [shape = 'u8[512]{0}', space=smem, size = 0x200, scoped, tag = 'input window, operand 0, single buffered']
    #allocation4 [shape = 's32[1]{0}', space=sflag, size = 0x4, scoped, tag = 'scoped memory for tpu_custom_call.1']
    %11 = vsyncpa [#allocation4], 0
    // Predicated region
    $region2: #{tpu_custom_call.1} parent=1 // pred_check
      _
    $region3: #{tpu_custom_call.1} parent=1 // pred_check_branch
      %13 = sbr.rel (0) target = $region5
    $region4: #{tpu_custom_call.1} parent=1 // pred_region
      %s15 = ssub.s32 16, 16
      %16 = vsyncadd [#allocation4], %s15
      %s18 = sshll.u32 %s0, 4
      %s19 = int_to_ptr.vmem [resolvable:$true] %s18
      %21 = dma.vmem_to_smem %s19, 16, [#allocation3], [#allocation4]
    $region5: #{tpu_custom_call.1} parent=1 // pred_fallthru
      _
    // Predicated region
    $region6: #{tpu_custom_call.1} parent=1 // pred_check
      _
    $region7: #{tpu_custom_call.1} parent=1 // pred_check_branch
      %23 = sbr.rel (0) target = $region9
    $region8: #{tpu_custom_call.1} parent=1 // pred_region
      _
    $region9: #{tpu_custom_call.1} parent=1 // pred_fallthru
      _
    // Predicated region
    $region10: #{tpu_custom_call.1} parent=1 // pred_check
      _
    $region11: #{tpu_custom_call.1} parent=1 // pred_check_branch
      %25 = sbr.rel (0) target = $region13
    $region12: #{tpu_custom_call.1} parent=1 // pred_region
      _
    $region13: #{tpu_custom_call.1} parent=1 // pred_fallthru
      _
    // Predicated region
    $region14: #{tpu_custom_call.1} parent=1 // pred_check
      _
    $region15: #{tpu_custom_call.1} parent=1 // pred_check_branch
      %27 = sbr.rel (0) target = $region17
    $region16: #{tpu_custom_call.1} parent=1 // pred_region
      _
    $region17: #{tpu_custom_call.1} parent=1 // pred_fallthru
      _
    // Predicated region
    $region18: #{tpu_custom_call.1} parent=1 // pred_check
      _
    $region19: #{tpu_custom_call.1} parent=1 // pred_check_branch
      %29 = sbr.rel (0) target = $region21
    $region20: #{tpu_custom_call.1} parent=1 // pred_region
      _
    $region21: #{tpu_custom_call.1} parent=1 // pred_fallthru
      _
    // Predicated region
    $region22: #{tpu_custom_call.1} parent=1 // pred_check
      _
    $region23: #{tpu_custom_call.1} parent=1 // pred_check_branch
      %31 = sbr.rel (0) target = $region25
    $region24: #{tpu_custom_call.1} parent=1 // pred_region
      _
    $region25: #{tpu_custom_call.1} parent=1 // pred_fallthru
      _
    // Predicated region
    $region26: #{tpu_custom_call.1} parent=1 // pred_check
      _
    $region27: #{tpu_custom_call.1} parent=1 // pred_check_branch
      %33 = sbr.rel (0) target = $region29
    $region28: #{tpu_custom_call.1} parent=1 // pred_region
      %34 = dma.done [#allocation4], 16
    $region29: #{tpu_custom_call.1} parent=1 // pred_fallthru
      _
    %35 = sfence
    %p36 = scmp.eq.s32.totalorder 0, 0
    // Predicated region
    $region30: #{tpu_custom_call.1} parent=1 // pred_check
      %p37 = pneg %p36
    $region31: #{tpu_custom_call.1} parent=1 // pred_check_branch
      %39 = sbr.rel (%p37) target = $region33
    $region32: #{tpu_custom_call.1} parent=1 // pred_region
      %40 = vst [vmem:[#allocation2] sm:$0xff] 0.0
      %41 = vst [vmem:[#allocation2 + $0x8] sm:$0xff] 0.0
    $region33: #{tpu_custom_call.1} parent=1 // pred_fallthru
      _
    %s42 = sld [smem:[#allocation3]]
    %s43 = sld [smem:[#allocation3 + $0x1]]
    %v44 = vld [vmem:[%s1] sm:$0xff]
    %v45 = vld [vmem:[%s1 + $0x8] sm:$0xff]
    %v46 = vld [vmem:[%s3] sm:$0xff]
    %v48 = vcombine.high %v46, %v46
    %vm49 = vcmask 31744
    %v51 = vsel %vm49, %v44, 0
    %v54 = vsel %vm49, %v45, 0
    %vm56 = vcmask 1043456
    %v57 = vsel %vm56, %v46, 0
    %v59 = vsel %vm56, %v48, 0
    %61 = vmatprep.subr.mxu0 %v59
    %62 = vmatpush1.msra.mxu0 %v57
    %63 = vmatprep.subr.mxu0 0.0
    %64 = vmatpush1.msra.mxu0 0.0
    %65 = vmatprep.subr.mxu0 0.0
    %66 = vmatpush1.msra.mxu0 0.0
    %67 = vmatprep.subr.mxu0 0.0
    %68 = vmatpush1.msra.mxu0 0.0
    %69 = vmatprep.subr.mxu0 0.0
    %70 = vmatpush1.msra.mxu0 0.0
    %71 = vmatprep.subr.mxu0 0.0
    %72 = vmatpush1.msra.mxu0 0.0
    %73 = vmatprep.subr.mxu0 0.0
    %74 = vmatpush1.msra.mxu0 0.0
    %75 = vmatprep.subr.mxu0 0.0
    %76 = vmatpush1.msra.mxu0 0.0
    %77 = vmatprep.subr.mxu0 0.0
    %78 = vmatpush1.msra.mxu0 0.0
    %79 = vmatprep.subr.mxu0 0.0
    %80 = vmatpush1.msra.mxu0 0.0
    %81 = vmatprep.subr.mxu0 0.0
    %82 = vmatpush1.msra.mxu0 0.0
    %83 = vmatprep.subr.mxu0 0.0
    %84 = vmatpush1.msra.mxu0 0.0
    %85 = vmatprep.subr.mxu0 0.0
    %86 = vmatpush1.msra.mxu0 0.0
    %87 = vmatprep.subr.mxu0 0.0
    %88 = vmatpush1.msra.mxu0 0.0
    %89 = vmatprep.subr.mxu0 0.0
    %90 = vmatpush1.msra.mxu0 0.0
    %91 = vmatprep.subr.mxu0 0.0
    %92 = vmatpush1.msra.mxu0 0.0
    %93 = vmatprep.subr.mxu0 0.0
    %94 = vmatpush1.msra.mxu0 0.0
    %95 = vmatprep.subr.mxu0 0.0
    %96 = vmatpush1.msra.mxu0 0.0
    %97 = vmatprep.subr.mxu0 0.0
    %98 = vmatpush1.msra.mxu0 0.0
    %99 = vmatprep.subr.mxu0 0.0
    %100 = vmatpush1.msra.mxu0 0.0
    %101 = vmatprep.subr.mxu0 0.0
    %102 = vmatpush1.msra.mxu0 0.0
    %103 = vmatprep.subr.mxu0 0.0
    %104 = vmatpush1.msra.mxu0 0.0
    %105 = vmatprep.subr.mxu0 0.0
    %106 = vmatpush1.msra.mxu0 0.0
    %107 = vmatprep.subr.mxu0 0.0
    %108 = vmatpush1.msra.mxu0 0.0
    %109 = vmatprep.subr.mxu0 0.0
    %110 = vmatpush1.msra.mxu0 0.0
    %111 = vmatprep.subr.mxu0 0.0
    %112 = vmatpush1.msra.mxu0 0.0
    %113 = vmatprep.subr.mxu0 0.0
    %114 = vmatpush1.msra.mxu0 0.0
    %115 = vmatprep.subr.mxu0 0.0
    %116 = vmatpush1.msra.mxu0 0.0
    %117 = vmatprep.subr.mxu0 0.0
    %118 = vmatpush1.msra.mxu0 0.0
    %119 = vmatprep.subr.mxu0 0.0
    %120 = vmatpush1.msra.mxu0 0.0
    %121 = vmatprep.subr.mxu0 0.0
    %122 = vmatpush1.msra.mxu0 0.0
    %123 = vmatprep.subr.mxu0 0.0
    %124 = vmatpush1.msra.mxu0 0.0
    %125 = vmatprep.mubr.f32.mxu0 0.0
    %126 = vmatmul.mubr.f32.gmra.mrb[0].mxu0 %v51
    %v127 = vpop.f32.mrb[0].mxu0
    %v128 = vadd.f32 0.0, %v127
    %v129 = vpop.f32.mrb[0].mxu0
    %v130 = vadd.f32 0.0, %v129
    %131 = vmatprep.mubr.f32.mxu0 0.0
    %132 = vmatmul.mubr.f32.gmra.mrb[0].mxu0 %v54
    %v133 = vpop.f32.mrb[0].mxu0
    %v134 = vadd.f32 0.0, %v133
    %v135 = vpop.f32.mrb[0].mxu0
    %v136 = vadd.f32 0.0, %v135
    %137 = vdwg.mxu0
    %v138 = vld [vmem:[%s2] sm:$0xff]
    %v139 = vld [vmem:[%s2 + $0x8] sm:$0xff]
    %v140 = vld [vmem:[%s4] sm:$0x3]
    %142 = vset.pattern.permute.xlu0 0
    %143 = vperm.xlu0 %142, %v138
    %v144 = vpop.permute.xlu0 %143
    %147 = vset.pattern.permute.xlu0 0
    %148 = vperm.xlu0 %147, %v139
    %v149 = vpop.permute.xlu0 %148
    %v152 = vlaneseq
    %v153 = vshrl.u32 %v152, 7
    %v154 = vsub.s32 0, %v153
    %v155 = vrot.slane %v140, %v154
    %v156 = vlaneseq
    %v157 = vshrl.u32 %v156, 7
    %v158 = vsub.s32 1, %v157
    %v159 = vrot.slane %v140, %v158
    %v162 = vadd.f32 %v144, %v155
    %v163 = vadd.f32 %v144, %v159
    %v164 = vadd.f32 %v149, %v155
    %v165 = vadd.f32 %v149, %v159
    %v166 = vsub.f32 %v162, %v128
    %v167 = vsub.f32 %v163, %v130
    %v168 = vsub.f32 %v164, %v134
    %v169 = vsub.f32 %v165, %v136
    %v170 = vmax.f32 %v166, 0.0
    %v171 = vmax.f32 %v167, 0.0
    %v172 = vmax.f32 %v168, 0.0
    %v173 = vmax.f32 %v169, 0.0
    %v174 = vstv %s42
    %v175 = vmul.f32 %v170, %v174
    %v176 = vmul.f32 %v171, %v174
    %v177 = vmul.f32 %v172, %v174
    %v178 = vmul.f32 %v173, %v174
    %v179 = vadd.f32 %v175, 1.0
    %v180 = vadd.f32 %v176, 1.0
    %v181 = vadd.f32 %v177, 1.0
    %v182 = vadd.f32 %v178, 1.0
    %v183 = vlog2.pop %v179
    %v184 = vmul.f32 %v183, 0.6931472
    %v185 = vlog2.pop %v180
    %v186 = vmul.f32 %v185, 0.6931472
    %v187 = vlog2.pop %v181
    %v188 = vmul.f32 %v187, 0.6931472
    %v189 = vlog2.pop %v182
    %v190 = vmul.f32 %v189, 0.6931472
    %v191 = vstv %s43
    %v192 = vmul.f32 %v191, %v184
    %v193 = vmul.f32 %v191, %v186
    %v194 = vmul.f32 %v191, %v188
    %v195 = vmul.f32 %v191, %v190
    %v196 = vmul.f32 %v192, 1.442695
    %v197 = vpow.pop %v196
    %v198 = vmul.f32 %v193, 1.442695
    %v199 = vpow.pop %v198
    %v200 = vmul.f32 %v194, 1.442695
    %v201 = vpow.pop %v200
    %v202 = vmul.f32 %v195, 1.442695
    %v203 = vpow.pop %v202
    %v204 = vld [vmem:[%s5] sm:$0x3]
    %v206 = vlaneseq
    %v207 = vshrl.u32 %v206, 7
    %v208 = vsub.s32 0, %v207
    %v209 = vrot.slane %v204, %v208
    %v210 = vlaneseq
    %v211 = vshrl.u32 %v210, 7
    %v212 = vsub.s32 1, %v211
    %v213 = vrot.slane %v204, %v212
    %v216 = vmul.f32 %v197, %v209
    %v217 = vmul.f32 %v199, %v213
    %v218 = vmul.f32 %v201, %v209
    %v219 = vmul.f32 %v203, %v213
    %v220 = vld [vmem:[#allocation2] sm:$0xff]
    %v221 = vld [vmem:[#allocation2 + $0x8] sm:$0xff]
    %v222 = vadd.f32 %v220, %v216
    %v223 = vadd.f32 %v221, %v218
    %v224 = vadd.f32 %v222, %v217
    %v225 = vadd.f32 %v223, %v219
    %226 = vst [vmem:[#allocation2] sm:$0xff] %v224
    %227 = vst [vmem:[#allocation2 + $0x8] sm:$0xff] %v225
    // Predicated region
    $region34: #{tpu_custom_call.1} parent=1 // pred_check
      %p228 = pneg %p36
    $region35: #{tpu_custom_call.1} parent=1 // pred_check_branch
      %230 = sbr.rel (%p228) target = $region37
    $region36: #{tpu_custom_call.1} parent=1 // pred_region
      %v231 = vld [vmem:[#allocation2] sm:$0xff]
      %v232 = vld [vmem:[#allocation2 + $0x8] sm:$0xff]
      %233 = vadd.xlane.f32.xlu0 %v231
      %v234 = vpop.xlane.xlu0 %233
      %235 = vadd.xlane.f32.xlu0 %v232
      %v236 = vpop.xlane.xlu0 %235
      %vm237 = vcmask 7168
      %238 = vst.msk [vmem:[%s6] sm:$0xff] %vm237, %v234
      %239 = vst.msk [vmem:[%s6 + $0x8] sm:$0xff] %vm237, %v236
    $region37: #{tpu_custom_call.1} parent=1 // pred_fallthru
      _
    // Predicated region
    $region38: #{tpu_custom_call.1} parent=1 // pred_check
      _
    $region39: #{tpu_custom_call.1} parent=1 // pred_check_branch
      %241 = sbr.rel (0) target = $region41
    $region40: #{tpu_custom_call.1} parent=1 // pred_region
      _
    $region41: #{tpu_custom_call.1} parent=1 // pred_fallthru
      _
    // Predicated region
    $region42: #{tpu_custom_call.1} parent=1 // pred_check
      _
    $region43: #{tpu_custom_call.1} parent=1 // pred_check_branch
      %243 = sbr.rel (0) target = $region45
    $region44: #{tpu_custom_call.1} parent=1 // pred_region
      _
    $region45: #{tpu_custom_call.1} parent=1 // pred_fallthru
      _
    %244 = vsyncpa [#allocation4], 1

</llo_original>
